<compile_context>
chip_gen: v7x
topology: tpu7x:2x2x1
jax: 0.10.0
libtpu: 0.0.40
codegen_flags: <defaults>
</compile_context>

<pallas_src>
import jax
import jax.numpy as jnp
from jax.experimental import pallas as pl
from jax.experimental.pallas import tpu as pltpu


def _choose_spatial_tile(S, C, itemsize, max_block_bytes=2 << 20):
    """Largest lane-aligned spatial tile whose (C, TS) block fits the budget.

    ~2 MiB per block keeps the double-buffered working set (2 inputs + output
    for the normalize pass) well inside the default scoped-VMEM limit on
    v5e (16 MiB) / v6e (32 MiB) / v7x (32 MiB of 64 MiB physical), while each
    grid step still moves enough bytes that the ~0.35 us per-step overhead is
    negligible against HBM DMA time.
    """
    if C * S * itemsize <= max_block_bytes:
        return S                                  # whole spatial extent per block
    ts = (max_block_bytes // (C * itemsize)) // 128 * 128
    return max(128, min(int(ts), S))


def _tile_sum(a):
    """(rows, lanes) -> (1, 1) partial sum (lane reduce then sublane reduce)."""
    return jnp.sum(jnp.sum(a, axis=1, keepdims=True), axis=0, keepdims=True)


def zero_masked_layer_norm(x, eps=1e-5):
    """Forward of ZeroMaskedLayerNorm(masked=True, std=True, affine=False).

    x: (B, C, *spatial) float array. Returns an array of the same shape/dtype.
    """
    # TODO(synk): non-default configs (masked=False, std=False, affine=True)
    # are not implemented; this covers the module's default forward path.
    orig_shape = x.shape
    B, C = int(x.shape[0]), int(x.shape[1])
    S = 1
    for d in x.shape[2:]:
        S *= int(d)
    x3 = x.reshape(B, C, S)                       # contiguous view, no HBM copy
    itemsize = x.dtype.itemsize

    TS = _choose_spatial_tile(S, C, itemsize)
    n_s = pl.cdiv(S, TS)

    # ------------------------------------------------------------------ pass 1
    def stats_kernel(x_ref, cnt_ref, s1_ref, s2_ref):
        si = pl.program_id(1)

        @pl.when(si == 0)
        def _():
            cnt_ref[...] = jnp.zeros_like(cnt_ref)
            s1_ref[...] = jnp.zeros_like(s1_ref)
            s2_ref[...] = jnp.zeros_like(s2_ref)

        xf = x_ref[0].astype(jnp.float32)         # (C, TS)
        m = xf[0:1, :] != 0.0                     # (1, TS) mask from channel 0
        if S % TS != 0:                           # static; mask the ragged tail
            lane = jax.lax.broadcasted_iota(jnp.int32, (1, TS), 1)
            m = jnp.logical_and(m, si * TS + lane < S)
        mf = m.astype(jnp.float32)
        xm = jnp.where(m, xf, 0.0)                # (C, TS), masked values

        cnt_ref[0] += _tile_sum(mf) * float(C)    # every channel counts per pos
        s1_ref[0] += _tile_sum(xm)
        s2_ref[0] += _tile_sum(xm * xm)

    stat_shape = jax.ShapeDtypeStruct((B, 1, 1), jnp.float32)
    stat_spec = pl.BlockSpec((1, 1, 1), lambda b, s: (b, 0, 0))
    cnt, s1, s2 = pl.pallas_call(
        stats_kernel,
        out_shape=(stat_shape, stat_shape, stat_shape),
        grid_spec=pltpu.PrefetchScalarGridSpec(
            num_scalar_prefetch=0,
            grid=(B, n_s),
            in_specs=[pl.BlockSpec((1, C, TS), lambda b, s: (b, 0, s))],
            out_specs=[stat_spec, stat_spec, stat_spec],
        ),
        compiler_params=pltpu.CompilerParams(
            dimension_semantics=("parallel", "arbitrary")),
        cost_estimate=pl.CostEstimate(
            flops=5 * B * C * S, transcendentals=0,
            bytes_accessed=B * C * S * itemsize),
    )(x3)

    cnt = cnt.reshape(B)
    s1 = s1.reshape(B)
    s2 = s2.reshape(B)

    # Tiny per-batch scalar math in plain JAX (mirrors the torch fallbacks:
    # empty mask -> mean 0 / std 1; a single masked element -> std is NaN).
    empty = cnt == 0.0
    mean = jnp.where(empty, 0.0, s1 / jnp.where(empty, 1.0, cnt))
    var = (s2 - cnt * mean * mean) / (cnt - 1.0)
    std = jnp.where(empty, 1.0, jnp.sqrt(jnp.maximum(var, 0.0)))
    inv = 1.0 / (std + jnp.float32(eps))
    params = jnp.stack([mean, inv], axis=1).astype(jnp.float32)   # (B, 2)

    # ------------------------------------------------------------------ pass 2
    def norm_kernel(params_ref, x_ref, y_ref):
        b = pl.program_id(0)
        mu = params_ref[b, 0]
        iv = params_ref[b, 1]
        y_ref[...] = ((x_ref[...].astype(jnp.float32) - mu) * iv).astype(
            y_ref.dtype)

    y3 = pl.pallas_call(
        norm_kernel,
        out_shape=jax.ShapeDtypeStruct((B, C, S), x.dtype),
        grid_spec=pltpu.PrefetchScalarGridSpec(
            num_scalar_prefetch=1,
            grid=(B, n_s),
            in_specs=[pl.BlockSpec((1, C, TS), lambda b, s, p: (b, 0, s))],
            out_specs=pl.BlockSpec((1, C, TS), lambda b, s, p: (b, 0, s)),
        ),
        compiler_params=pltpu.CompilerParams(
            dimension_semantics=("parallel", "parallel")),
        cost_estimate=pl.CostEstimate(
            flops=2 * B * C * S, transcendentals=0,
            bytes_accessed=2 * B * C * S * itemsize),
    )(params, x3)

    return y3.reshape(orig_shape)


def _reference(x, eps=1e-5):
    """Pure-JAX mirror of the PyTorch module (defaults), for checking."""
    B, C = x.shape[0], x.shape[1]
    xf = x.reshape(B, C, -1).astype(jnp.float32)
    m = xf[:, 0:1, :] != 0.0
    mf = jnp.broadcast_to(m, xf.shape).astype(jnp.float32)
    cnt = jnp.sum(mf, axis=(1, 2))
    mean = jnp.sum(xf * mf, axis=(1, 2)) / cnt
    diff = (xf - mean[:, None, None]) * mf
    var = jnp.sum(diff * diff, axis=(1, 2)) / (cnt - 1.0)
    std = jnp.sqrt(var)
    y = (xf - mean[:, None, None]) / (std[:, None, None] + eps)
    return y.reshape(x.shape)


if __name__ == "__main__":
    key = jax.random.PRNGKey(0)
    B, C, H, W = 2, 4, 16, 16
    k1, k2 = jax.random.split(key)
    x = jax.random.normal(k1, (B, C, H, W), dtype=jnp.float32)
    # Zero out ~30% of the mask channel (channel 0) so masking is exercised.
    drop = jax.random.bernoulli(k2, 0.3, (B, H, W))
    x = x.at[:, 0].set(jnp.where(drop, 0.0, x[:, 0]))

    y = zero_masked_layer_norm(x, eps=1e-5)
    y = jax.block_until_ready(y)

    y_ref = _reference(x, eps=1e-5)

    assert y.shape == x.shape, y.shape
    assert bool(jnp.all(jnp.isfinite(y))), "non-finite output"
    assert jnp.allclose(y, y_ref, atol=1e-3, rtol=1e-3), (
        "max abs err = %g" % float(jnp.max(jnp.abs(y - y_ref))))

    print("KERNEL_OK")
</pallas_src>

<mosaic_0001>
module attributes {stable_mosaic.version = 11 : i64} {
  func.func @stats_kernel(%arg0: i32, %arg1: i32, %arg2: memref<1x4x256xf32, #tpu.memory_space<vmem>>, %arg3: memref<1x1x1xf32, #tpu.memory_space<vmem>>, %arg4: memref<1x1x1xf32, #tpu.memory_space<vmem>>, %arg5: memref<1x1x1xf32, #tpu.memory_space<vmem>>) attributes {dimension_semantics = [#tpu.dimension_semantics<parallel>, #tpu.dimension_semantics<arbitrary>], iteration_bounds = array<i64: 2, 1>, scalar_prefetch = 0 : i64, scratch_operands = 0 : i64, tpu.core_type = #tpu.core_type<tc>, window_params = [{transform_indices = @transform_0, window_bounds = array<i64: 1, 4, 256>}, {transform_indices = @transform_1, window_bounds = array<i64: 1, 1, 1>}, {transform_indices = @transform_2, window_bounds = array<i64: 1, 1, 1>}, {transform_indices = @transform_3, window_bounds = array<i64: 1, 1, 1>}]} {
    %c0_i32 = arith.constant 0 : i32
    %0 = arith.cmpi eq, %arg1, %c0_i32 : i32
    %1 = arith.extui %0 : i1 to i32
    %c0_i32_0 = arith.constant 0 : i32
    %2 = arith.cmpi ne, %1, %c0_i32_0 : i32
    scf.if %2 {
      %cst_29 = arith.constant 0.000000e+00 : f32
      %47 = vector.broadcast %cst_29 : f32 to vector<1x1x1xf32>
      %c0_30 = arith.constant 0 : index
      %c0_31 = arith.constant 0 : index
      %c0_32 = arith.constant 0 : index
      %48 = vector.load %arg3[%c0_30, %c0_31, %c0_32] : memref<1x1x1xf32, #tpu.memory_space<vmem>>, vector<1x1x1xf32>
      tpu.vector_store %arg3[%c0_30, %c0_31, %c0_32], %47 {strides = array<i32>} : memref<1x1x1xf32, #tpu.memory_space<vmem>>, vector<1x1x1xf32>,
      %cst_33 = arith.constant 0.000000e+00 : f32
      %49 = vector.broadcast %cst_33 : f32 to vector<1x1x1xf32>
      %c0_34 = arith.constant 0 : index
      %c0_35 = arith.constant 0 : index
      %c0_36 = arith.constant 0 : index
      %50 = vector.load %arg4[%c0_34, %c0_35, %c0_36] : memref<1x1x1xf32, #tpu.memory_space<vmem>>, vector<1x1x1xf32>
      tpu.vector_store %arg4[%c0_34, %c0_35, %c0_36], %49 {strides = array<i32>} : memref<1x1x1xf32, #tpu.memory_space<vmem>>, vector<1x1x1xf32>,
      %cst_37 = arith.constant 0.000000e+00 : f32
      %51 = vector.broadcast %cst_37 : f32 to vector<1x1x1xf32>
      %c0_38 = arith.constant 0 : index
      %c0_39 = arith.constant 0 : index
      %c0_40 = arith.constant 0 : index
      %52 = vector.load %arg5[%c0_38, %c0_39, %c0_40] : memref<1x1x1xf32, #tpu.memory_space<vmem>>, vector<1x1x1xf32>
      tpu.vector_store %arg5[%c0_38, %c0_39, %c0_40], %51 {strides = array<i32>} : memref<1x1x1xf32, #tpu.memory_space<vmem>>, vector<1x1x1xf32>,
    } else {
    }
    %c0 = arith.constant 0 : index
    %c0_1 = arith.constant 0 : index
    %c0_2 = arith.constant 0 : index
    %3 = vector.load %arg2[%c0, %c0_1, %c0_2] : memref<1x4x256xf32, #tpu.memory_space<vmem>>, vector<1x4x256xf32>
    %4 = vector.shape_cast %3 : vector<1x4x256xf32> to vector<4x256xf32>
    %5 = vector.extract_strided_slice %4 {offsets = [0, 0], sizes = [1, 256], strides = [1, 1]} : vector<4x256xf32> to vector<1x256xf32>
    %cst = arith.constant 0.000000e+00 : f32
    %6 = vector.broadcast %cst : f32 to vector<1x256xf32>
    %7 = arith.cmpf one, %5, %6 : vector<1x256xf32>
    %8 = arith.extui %7 : vector<1x256xi1> to vector<1x256xi32>
    %9 = arith.sitofp %8 : vector<1x256xi32> to vector<1x256xf32>
    %cst_3 = arith.constant 0.000000e+00 : f32
    %10 = vector.shape_cast %7 : vector<1x256xi1> to vector<1x256xi1>
    %11 = vector.broadcast %10 : vector<1x256xi1> to vector<4x256xi1>
    %12 = vector.broadcast %cst_3 : f32 to vector<4x256xf32>
    %13 = arith.select %11, %4, %12 : vector<4x256xi1>, vector<4x256xf32>
    %c0_4 = arith.constant 0 : index
    %c0_5 = arith.constant 0 : index
    %c0_6 = arith.constant 0 : index
    %14 = vector.load %arg3[%c0_4, %c0_5, %c0_6] : memref<1x1x1xf32, #tpu.memory_space<vmem>>, vector<1x1x1xf32>
    %15 = vector.shape_cast %14 : vector<1x1x1xf32> to vector<1x1xf32>
    %cst_7 = arith.constant dense<0.000000e+00> : vector<1xf32>
    %16 = vector.multi_reduction <add>, %9, %cst_7 [1] : vector<1x256xf32> to vector<1xf32>
    %17 = vector.shape_cast %16 : vector<1xf32> to vector<1x1xf32>
    %cst_8 = arith.constant dense<0.000000e+00> : vector<1xf32>
    %18 = vector.multi_reduction <add>, %17, %cst_8 [0] : vector<1x1xf32> to vector<1xf32>
    %19 = vector.shape_cast %18 : vector<1xf32> to vector<1x1xf32>
    %cst_9 = arith.constant 4.000000e+00 : f32
    %20 = vector.broadcast %cst_9 : f32 to vector<1x1xf32>
    %21 = arith.mulf %19, %20 : vector<1x1xf32>
    %22 = arith.addf %15, %21 : vector<1x1xf32>
    %c0_10 = arith.constant 0 : index
    %c0_11 = arith.constant 0 : index
    %c0_12 = arith.constant 0 : index
    %23 = vector.load %arg3[%c0_10, %c0_11, %c0_12] : memref<1x1x1xf32, #tpu.memory_space<vmem>>, vector<1x1x1xf32>
    %24 = vector.shape_cast %23 : vector<1x1x1xf32> to vector<1x1xf32>
    %25 = vector.shape_cast %22 : vector<1x1xf32> to vector<1x1x1xf32>
    tpu.vector_store %arg3[%c0_10, %c0_11, %c0_12], %25 {strides = array<i32>} : memref<1x1x1xf32, #tpu.memory_space<vmem>>, vector<1x1x1xf32>,
    %c0_13 = arith.constant 0 : index
    %c0_14 = arith.constant 0 : index
    %c0_15 = arith.constant 0 : index
    %26 = vector.load %arg4[%c0_13, %c0_14, %c0_15] : memref<1x1x1xf32, #tpu.memory_space<vmem>>, vector<1x1x1xf32>
    %27 = vector.shape_cast %26 : vector<1x1x1xf32> to vector<1x1xf32>
    %cst_16 = arith.constant dense<0.000000e+00> : vector<4xf32>
    %28 = vector.multi_reduction <add>, %13, %cst_16 [1] : vector<4x256xf32> to vector<4xf32>
    %29 = vector.shape_cast %28 : vector<4xf32> to vector<4x1xf32>
    %cst_17 = arith.constant dense<0.000000e+00> : vector<1xf32>
    %30 = vector.multi_reduction <add>, %29, %cst_17 [0] : vector<4x1xf32> to vector<1xf32>
    %31 = vector.shape_cast %30 : vector<1xf32> to vector<1x1xf32>
    %32 = arith.addf %27, %31 : vector<1x1xf32>
    %c0_18 = arith.constant 0 : index
    %c0_19 = arith.constant 0 : index
    %c0_20 = arith.constant 0 : index
    %33 = vector.load %arg4[%c0_18, %c0_19, %c0_20] : memref<1x1x1xf32, #tpu.memory_space<vmem>>, vector<1x1x1xf32>
    %34 = vector.shape_cast %33 : vector<1x1x1xf32> to vector<1x1xf32>
    %35 = vector.shape_cast %32 : vector<1x1xf32> to vector<1x1x1xf32>
    tpu.vector_store %arg4[%c0_18, %c0_19, %c0_20], %35 {strides = array<i32>} : memref<1x1x1xf32, #tpu.memory_space<vmem>>, vector<1x1x1xf32>,
    %c0_21 = arith.constant 0 : index
    %c0_22 = arith.constant 0 : index
    %c0_23 = arith.constant 0 : index
    %36 = vector.load %arg5[%c0_21, %c0_22, %c0_23] : memref<1x1x1xf32, #tpu.memory_space<vmem>>, vector<1x1x1xf32>
    %37 = vector.shape_cast %36 : vector<1x1x1xf32> to vector<1x1xf32>
    %38 = arith.mulf %13, %13 : vector<4x256xf32>
    %cst_24 = arith.constant dense<0.000000e+00> : vector<4xf32>
    %39 = vector.multi_reduction <add>, %38, %cst_24 [1] : vector<4x256xf32> to vector<4xf32>
    %40 = vector.shape_cast %39 : vector<4xf32> to vector<4x1xf32>
    %cst_25 = arith.constant dense<0.000000e+00> : vector<1xf32>
    %41 = vector.multi_reduction <add>, %40, %cst_25 [0] : vector<4x1xf32> to vector<1xf32>
    %42 = vector.shape_cast %41 : vector<1xf32> to vector<1x1xf32>
    %43 = arith.addf %37, %42 : vector<1x1xf32>
    %c0_26 = arith.constant 0 : index
    %c0_27 = arith.constant 0 : index
    %c0_28 = arith.constant 0 : index
    %44 = vector.load %arg5[%c0_26, %c0_27, %c0_28] : memref<1x1x1xf32, #tpu.memory_space<vmem>>, vector<1x1x1xf32>
    %45 = vector.shape_cast %44 : vector<1x1x1xf32> to vector<1x1xf32>
    %46 = vector.shape_cast %43 : vector<1x1xf32> to vector<1x1x1xf32>
    tpu.vector_store %arg5[%c0_26, %c0_27, %c0_28], %46 {strides = array<i32>} : memref<1x1x1xf32, #tpu.memory_space<vmem>>, vector<1x1x1xf32>,
    return
  }
  func.func @transform_0(%arg0: i32, %arg1: i32) -> (i32, i32, i32) {
    %c0_i32 = arith.constant 0 : i32
    %c0_i32_0 = arith.constant 0 : i32
    return %arg0, %c0_i32, %arg1 : i32, i32, i32
  }
  func.func @transform_1(%arg0: i32, %arg1: i32) -> (i32, i32, i32) {
    %c0_i32 = arith.constant 0 : i32
    %c0_i32_0 = arith.constant 0 : i32
    %c0_i32_1 = arith.constant 0 : i32
    return %arg0, %c0_i32, %c0_i32_0 : i32, i32, i32
  }
  func.func @transform_2(%arg0: i32, %arg1: i32) -> (i32, i32, i32) {
    %c0_i32 = arith.constant 0 : i32
    %c0_i32_0 = arith.constant 0 : i32
    %c0_i32_1 = arith.constant 0 : i32
    return %arg0, %c0_i32, %c0_i32_0 : i32, i32, i32
  }
  func.func @transform_3(%arg0: i32, %arg1: i32) -> (i32, i32, i32) {
    %c0_i32 = arith.constant 0 : i32
    %c0_i32_0 = arith.constant 0 : i32
    %c0_i32_1 = arith.constant 0 : i32
    return %arg0, %c0_i32, %c0_i32_0 : i32, i32, i32
  }
}

</mosaic_0001>

<llo_original>
// kernel: tpu_custom_call.1
$region0: #{tpu_custom_call.1}
  #allocation0 [shape = 'u32[]', space=smem, size = 0x4, offset = 0x4, fixed_abs, tag = 'smem constant byte address 0x4 - core index']
  #allocation1 [shape = 'u32[144,128]{1,0:T(1,128)}', space=vmem, size = 0x12000, scoped, tag = 'internal scratch']
  %s0 = inlined_call_operand.hbm [shape: f32[2,4,256], index: 0, kind: input, shape index: {}]
  %s1 = inlined_call_operand.vmem [shape: f32[2,1,1], index: 1, kind: output, shape index: {0}]
  %s2 = inlined_call_operand.vmem [shape: f32[2,1,1], index: 2, kind: output, shape index: {1}]
  %s3 = inlined_call_operand.vmem [shape: f32[2,1,1], index: 3, kind: output, shape index: {2}]
  %4 = xla_tuple %s1, %s2, %s3
  %s5 = sld [smem:[#allocation0]]
  $region61: #{tpu_custom_call.1} parent=0
    _
  %s7 = ssub.s32 1, %s5
  %s8 = scalar_select 0, %s7, %s5
  $region1: #{tpu_custom_call.1} parent=0
    #allocation2 [shape = 'u8[8192]{0}', space=vmem, size = 0x2000, scoped, tag = 'input window, operand 0']
    #allocation3 [shape = 's32[2]{0}', space=sflag, size = 0x8, scoped, tag = 'scoped memory for tpu_custom_call.1']
    %9 = vsyncpa [#allocation3], 0
    %s10 = scalar_lea.sflag [#allocation3], 1
    %11 = vsyncpa %s10, 0
    loop: start=0, step=1, limit=4
    $region2: #{tpu_custom_call.1} parent=1 // loop_pre_header
      _
    $region3: #{tpu_custom_call.1} parent=1 // loop_header
      %s13 = sphi 0, %s17
      %p14 = scmp.ge.s32.totalorder %s13, 4
      %s20 = sphi 0, %s32
      %s21 = sphi 0, %s28
      %s22 = sphi 0, %s20
      %s23 = sphi 0, %s21
      %s24 = sphi 0, %s22
      %s25 = sphi 0, %s23
      %s37 = sphi 0, %s39
      %s40 = sphi 0, %s37
      %s41 = sphi 0, %s40
      %s57 = sphi 0, %s41
      %s63 = sphi 0, %s65
      %s66 = sphi 0, %s63
      %s67 = sphi 0, %s66
      %s83 = sphi 0, %s67
      %s89 = sphi 0, %s91
      %s92 = sphi 0, %s89
      %s93 = sphi 0, %s92
      %s109 = sphi 0, %s93
      %s115 = sphi 0, %s117
      %s118 = sphi 0, %s115
      %s119 = sphi 0, %s118
      %s135 = sphi 0, %s119
    $region4: #{tpu_custom_call.1} parent=1 // loop_header_branch
      %16 = sbr.rel (%p14) target = $region8
    $region5: #{tpu_custom_call.1} parent=1 // loop_body
      %s18 = ssub.s32 %s13, 1
      %s19 = ssub.s32 %s13, 2
      %s26 = sadd.s32 1, %s21
      %p27 = scmp.ge.s32.totalorder %s26, 1
      %s28 = scalar_select %p27, 0, %s26
      %s29 = sadd.s32 1, %s20
      %s30 = scalar_select %p27, %s29, %s20
      %p31 = scmp.ge.s32.totalorder %s30, 2
      %s32 = scalar_select %p31, 0, %s30
      %s33 = ssub.s32 %s20, %s32
      %s34 = ssub.s32 %s21, %s28
      %s35 = sor.u32 %s33, %s34
      %p36 = scmp.eq.s32.totalorder %s35, 0
      %s38 = sadd.s32 %s37, 1
      %s39 = scalar_select %p36, %s37, %s38
      %p42 = pneg %p36
      %p43 = scmp.eq.s32.totalorder %s13, 1
      %p44 = por %p42, %p43
      %p45 = scmp.ne.s32.totalorder %s37, %s40
      %p46 = scmp.eq.s32.totalorder %s13, 0
      %p47 = por %p45, %p46
      %p48 = scmp.ne.s32.totalorder %s37, %s40
      %p49 = scmp.eq.s32.totalorder %s18, 1
      %p50 = por %p48, %p49
      %p51 = scmp.ne.s32.totalorder %s40, %s41
      %p52 = scmp.eq.s32.totalorder %s18, 0
      %p53 = por %p51, %p52
      %p54 = scmp.ne.s32.totalorder %s40, %s41
      %p55 = scmp.eq.s32.totalorder %s19, 1
      %p56 = por %p54, %p55
      %p58 = scmp.ne.s32.totalorder %s41, %s57
      %p59 = scmp.eq.s32.totalorder %s19, 0
      %p60 = por %p58, %p59
      %s61 = ssub.s32 %s20, %s32
      %p62 = scmp.eq.s32.totalorder %s61, 0
      %s64 = sadd.s32 %s63, 1
      %s65 = scalar_select %p62, %s63, %s64
      %p68 = pneg %p62
      %p69 = scmp.eq.s32.totalorder %s13, 1
      %p70 = por %p68, %p69
      %p71 = scmp.ne.s32.totalorder %s63, %s66
      %p72 = scmp.eq.s32.totalorder %s13, 0
      %p73 = por %p71, %p72
      %p74 = scmp.ne.s32.totalorder %s63, %s66
      %p75 = scmp.eq.s32.totalorder %s18, 1
      %p76 = por %p74, %p75
      %p77 = scmp.ne.s32.totalorder %s66, %s67
      %p78 = scmp.eq.s32.totalorder %s18, 0
      %p79 = por %p77, %p78
      %p80 = scmp.ne.s32.totalorder %s66, %s67
      %p81 = scmp.eq.s32.totalorder %s19, 1
      %p82 = por %p80, %p81
      %p84 = scmp.ne.s32.totalorder %s67, %s83
      %p85 = scmp.eq.s32.totalorder %s19, 0
      %p86 = por %p84, %p85
      %s87 = ssub.s32 %s20, %s32
      %p88 = scmp.eq.s32.totalorder %s87, 0
      %s90 = sadd.s32 %s89, 1
      %s91 = scalar_select %p88, %s89, %s90
      %p94 = pneg %p88
      %p95 = scmp.eq.s32.totalorder %s13, 1
      %p96 = por %p94, %p95
      %p97 = scmp.ne.s32.totalorder %s89, %s92
      %p98 = scmp.eq.s32.totalorder %s13, 0
      %p99 = por %p97, %p98
      %p100 = scmp.ne.s32.totalorder %s89, %s92
      %p101 = scmp.eq.s32.totalorder %s18, 1
      %p102 = por %p100, %p101
      %p103 = scmp.ne.s32.totalorder %s92, %s93
      %p104 = scmp.eq.s32.totalorder %s18, 0
      %p105 = por %p103, %p104
      %p106 = scmp.ne.s32.totalorder %s92, %s93
      %p107 = scmp.eq.s32.totalorder %s19, 1
      %p108 = por %p106, %p107
      %p110 = scmp.ne.s32.totalorder %s93, %s109
      %p111 = scmp.eq.s32.totalorder %s19, 0
      %p112 = por %p110, %p111
      %s113 = ssub.s32 %s20, %s32
      %p114 = scmp.eq.s32.totalorder %s113, 0
      %s116 = sadd.s32 %s115, 1
      %s117 = scalar_select %p114, %s115, %s116
      %p120 = pneg %p114
      %p121 = scmp.eq.s32.totalorder %s13, 1
      %p122 = por %p120, %p121
      %p123 = scmp.ne.s32.totalorder %s115, %s118
      %p124 = scmp.eq.s32.totalorder %s13, 0
      %p125 = por %p123, %p124
      %p126 = scmp.ne.s32.totalorder %s115, %s118
      %p127 = scmp.eq.s32.totalorder %s18, 1
      %p128 = por %p126, %p127
      %p129 = scmp.ne.s32.totalorder %s118, %s119
      %p130 = scmp.eq.s32.totalorder %s18, 0
      %p131 = por %p129, %p130
      %p132 = scmp.ne.s32.totalorder %s118, %s119
      %p133 = scmp.eq.s32.totalorder %s19, 1
      %p134 = por %p132, %p133
      %p136 = scmp.ne.s32.totalorder %s119, %s135
      %p137 = scmp.eq.s32.totalorder %s19, 0
      %p138 = por %p136, %p137
      %p139 = scmp.le.s32.totalorder 1, %s13
      %p140 = scmp.lt.s32.totalorder %s13, 3
      %p141 = pnand %p139, %p140
      %p142 = pneg %p141
      // Predicated region
      $region9: #{tpu_custom_call.1} parent=5 // pred_check
        _
      $region10: #{tpu_custom_call.1} parent=5 // pred_check_branch
        %144 = sbr.rel (%p141) target = $region12
      $region11: #{tpu_custom_call.1} parent=5 // pred_region
        %s145 = ssub.s32 %s13, 1
      $region12: #{tpu_custom_call.1} parent=5 // pred_fallthru
        _
      %p146 = scmp.lt.s32.totalorder %s13, 2
      // Predicated region
      $region13: #{tpu_custom_call.1} parent=5 // pred_check
        %p147 = pneg %p146
      $region14: #{tpu_custom_call.1} parent=5 // pred_check_branch
        %149 = sbr.rel (%p147) target = $region16
      $region15: #{tpu_custom_call.1} parent=5 // pred_region
        // Predicated region
        $region17: #{tpu_custom_call.1} parent=15 // pred_check
          %p150 = pneg %p47
        $region18: #{tpu_custom_call.1} parent=15 // pred_check_branch
          %152 = sbr.rel (%p150) target = $region20
        $region19: #{tpu_custom_call.1} parent=15 // pred_region
          %s153 = sand.u32 %s37, 1
          %s154 = scalar_lea.sflag [#allocation3], %s153
          %s155 = sand.u32 %s37, 1
          %s156 = smul.addr %s155, 8
          %s157 = scalar_lea.vmem [#allocation2], %s156
          %s158 = smul.u32 2, %s21
          %s160 = ssub.s32 128, 128
          %161 = vsyncadd %s154, %s160
          %s162 = smul.addr %s20, 2
          %s163 = sadd.s32 %s158, %s162
          %s164 = smul.addr %s163, 64
          %s165 = scalar_lea.hbm %s0, %s164
          %s167 = sshll.u32 %s157, 4
          %s168 = int_to_ptr.vmem [resolvable:$true] %s167
          %170 = dma.hbm_to_vmem [thread:$0]  %s165, 128, %s168, %s154
        $region20: #{tpu_custom_call.1} parent=15 // pred_fallthru
          _
      $region16: #{tpu_custom_call.1} parent=5 // pred_fallthru
        _
      %p171 = scmp.le.s32.totalorder 1, %s13
      %p172 = scmp.lt.s32.totalorder %s13, 3
      %p173 = pnand %p171, %p172
      %p174 = pneg %p173
      // Predicated region
      $region21: #{tpu_custom_call.1} parent=5 // pred_check
        _
      $region22: #{tpu_custom_call.1} parent=5 // pred_check_branch
        %176 = sbr.rel (%p173) target = $region24
      $region23: #{tpu_custom_call.1} parent=5 // pred_region
        %s177 = ssub.s32 %s13, 1
        %s178 = sand.u32 %s40, 1
        %s179 = scalar_lea.sflag [#allocation3], %s178
        %s180 = sand.u32 %s40, 1
        %s181 = smul.addr %s180, 8
        %s182 = scalar_lea.vmem [#allocation2], %s181
        // Predicated region
        $region25: #{tpu_custom_call.1} parent=23 // pred_check
          %p183 = pneg %p53
        $region26: #{tpu_custom_call.1} parent=23 // pred_check_branch
          %185 = sbr.rel (%p183) target = $region28
        $region27: #{tpu_custom_call.1} parent=23 // pred_region
          %186 = dma.done %s179, 128
        $region28: #{tpu_custom_call.1} parent=23 // pred_fallthru
          _
        %s187 = sand.u32 %s40, 1
        %s188 = scalar_lea.sflag [#allocation3], %s187
        %s189 = sand.u32 %s40, 1
        %s190 = smul.addr %s189, 8
        %s191 = scalar_lea.vmem [#allocation2], %s190
        %p192 = pneg %p53
        %p193 = pneg %p50
        %p194 = pneg %p79
        %p195 = pneg %p76
        %p196 = scmp.lt.s32.totalorder %s22, 1
        %s197 = scalar_select %p196, %s22, 1
        %s198 = scalar_lea.vmem %s1, %s197
        %p199 = pneg %p105
        %p200 = pneg %p102
        %p201 = scmp.lt.s32.totalorder %s22, 1
        %s202 = scalar_select %p201, %s22, 1
        %s203 = scalar_lea.vmem %s2, %s202
        %p204 = pneg %p131
        %p205 = pneg %p128
        %p206 = scmp.lt.s32.totalorder %s22, 1
        %s207 = scalar_select %p206, %s22, 1
        %s208 = scalar_lea.vmem %s3, %s207
        %s209 = smul.u32 2, %s23
        %p210 = scmp.lt.s32.totalorder %s22, 1
        %s211 = scalar_select %p210, %s22, 1
        %s212 = scalar_lea.vmem %s1, %s211
        %p213 = scmp.lt.s32.totalorder %s22, 1
        %s214 = scalar_select %p213, %s22, 1
        %s215 = scalar_lea.vmem %s2, %s214
        %p216 = scmp.lt.s32.totalorder %s22, 1
        %s217 = scalar_select %p216, %s22, 1
        %s218 = scalar_lea.vmem %s3, %s217
        %p219 = scmp.eq.s32.totalorder %s23, 0
        // Predicated region
        $region29: #{tpu_custom_call.1} parent=23 // pred_check
          %p220 = pneg %p219
        $region30: #{tpu_custom_call.1} parent=23 // pred_check_branch
          %222 = sbr.rel (%p220) target = $region32
        $region31: #{tpu_custom_call.1} parent=23 // pred_region
          %vm223 = vcmask 0
          %224 = vst.msk [vmem:[%s212] sm:$0x1] %vm223, 0.0
          %225 = vst.msk [vmem:[%s215] sm:$0x1] %vm223, 0.0
          %226 = vst.msk [vmem:[%s218] sm:$0x1] %vm223, 0.0
        $region32: #{tpu_custom_call.1} parent=23 // pred_fallthru
          _
        %v227 = vld [vmem:[%s182] sm:$0xff]
        %vm228 = vcmp.ne.f32.partialorder %v227, 0.0
        %v229 = vsel %vm228, 1, 0
        %v230 = vcvt.s32.f32 %v229
        %v231 = vlaneseq
        %v232 = vshrl.u32 %v231, 7
        %v233 = vsub.s32 0, %v232
        %v234 = vrot.slane %v229, %v233
        %v235 = vlaneseq
        %v236 = vshrl.u32 %v235, 7
        %v237 = vsub.s32 4, %v236
        %v238 = vrot.slane %v229, %v237
        %v239 = vlaneseq
        %v240 = vshrl.u32 %v239, 7
        %v241 = vsub.s32 0, %v240
        %v242 = vrot.slane %v234, %v241
        %v243 = vlaneseq
        %v244 = vshrl.u32 %v243, 7
        %v245 = vsub.s32 0, %v244
        %v246 = vrot.slane %v238, %v245
        %vm247 = vcmp.eq.s32.totalorder %v242, 1
        %vm248 = vcmp.eq.s32.totalorder %v246, 1
        %v250 = vcombine.high %v227, %v227
        %v252 = vsel %vm247, %v227, 0.0
        %v253 = vsel %vm248, %v250, 0.0
        %v254 = vld [vmem:[%s212] sm:$0x1]
        %v256 = vlaneseq
        %v257 = vshrl.u32 %v256, 7
        %v258 = vsub.s32 0, %v257
        %v259 = vrot.slane %v230, %v258
        %v260 = vlaneseq
        %v261 = vshrl.u32 %v260, 7
        %v262 = vsub.s32 4, %v261
        %v263 = vrot.slane %v230, %v262
        %vm266 = vcmask 1040384
        %v267 = vsel %vm266, %v259, 0.0
        %v268 = vsel %vm266, %v263, 0.0
        %v269 = vadd.f32 %v267, %v268
        %270 = vadd.xlane.f32.xlu0 %v269
        %v271 = vpop.xlane.xlu0 %270
        %v272 = vadd.f32 %v271, 0.0
        %v273 = vmul.f32 %v272, 4.0
        %v274 = vadd.f32 %v254, %v273
        %vm275 = vcmask 0
        %276 = vst.msk [vmem:[%s212] sm:$0x1] %vm275, %v274
        %v277 = vld [vmem:[%s215] sm:$0x1]
        %vm278 = vcmask 1043456
        %v279 = vsel %vm278, %v252, 0.0
        %v280 = vsel %vm278, %v253, 0.0
        %v281 = vadd.f32 %v279, %v280
        %282 = vadd.xlane.f32.xlu0 %v281
        %v283 = vpop.xlane.xlu0 %282
        %v284 = vsel %vm278, %v283, 0.0
        %v285 = vrot.slane %v284, 4
        %v286 = vadd.f32 %v284, %v285
        %v287 = vrot.slane %v286, 2
        %v288 = vadd.f32 %v286, %v287
        %v289 = vrot.slane %v288, 1
        %v290 = vadd.f32 %v288, %v289
        %v291 = vadd.f32 %v277, %v290
        %292 = vst.msk [vmem:[%s215] sm:$0x1] %vm275, %v291
        %v293 = vld [vmem:[%s218] sm:$0x1]
        %v294 = vmul.f32 %v252, %v252
        %v295 = vmul.f32 %v253, %v253
        %v296 = vsel %vm278, %v294, 0.0
        %v297 = vsel %vm278, %v295, 0.0
        %v298 = vadd.f32 %v296, %v297
        %299 = vadd.xlane.f32.xlu0 %v298
        %v300 = vpop.xlane.xlu0 %299
        %v301 = vsel %vm278, %v300, 0.0
        %v302 = vrot.slane %v301, 4
        %v303 = vadd.f32 %v301, %v302
        %v304 = vrot.slane %v303, 2
        %v305 = vadd.f32 %v303, %v304
        %v306 = vrot.slane %v305, 1
        %v307 = vadd.f32 %v305, %v306
        %v308 = vadd.f32 %v293, %v307
        %309 = vst.msk [vmem:[%s218] sm:$0x1] %vm275, %v308
        %p310 = scmp.lt.s32.totalorder %s22, 1
        %s311 = scalar_select %p310, %s22, 1
        %s312 = scalar_lea.vmem %s1, %s311
        %p313 = scmp.lt.s32.totalorder %s22, 1
        %s314 = scalar_select %p313, %s22, 1
        %s315 = scalar_lea.vmem %s2, %s314
        %p316 = scmp.lt.s32.totalorder %s22, 1
        %s317 = scalar_select %p316, %s22, 1
        %s318 = scalar_lea.vmem %s3, %s317
        // Predicated region
        $region33: #{tpu_custom_call.1} parent=23 // pred_check
          %p319 = pneg %p76
        $region34: #{tpu_custom_call.1} parent=23 // pred_check_branch
          %321 = sbr.rel (%p319) target = $region36
        $region35: #{tpu_custom_call.1} parent=23 // pred_region
          _
        $region36: #{tpu_custom_call.1} parent=23 // pred_fallthru
          _
        // Predicated region
        $region37: #{tpu_custom_call.1} parent=23 // pred_check
          %p322 = pneg %p102
        $region38: #{tpu_custom_call.1} parent=23 // pred_check_branch
          %324 = sbr.rel (%p322) target = $region40
        $region39: #{tpu_custom_call.1} parent=23 // pred_region
          _
        $region40: #{tpu_custom_call.1} parent=23 // pred_fallthru
          _
        // Predicated region
        $region41: #{tpu_custom_call.1} parent=23 // pred_check
          %p325 = pneg %p128
        $region42: #{tpu_custom_call.1} parent=23 // pred_check_branch
          %327 = sbr.rel (%p325) target = $region44
        $region43: #{tpu_custom_call.1} parent=23 // pred_region
          _
        $region44: #{tpu_custom_call.1} parent=23 // pred_fallthru
          _
      $region24: #{tpu_custom_call.1} parent=5 // pred_fallthru
        _
      %p328 = scmp.le.s32.totalorder 2, %s13
      // Predicated region
      $region45: #{tpu_custom_call.1} parent=5 // pred_check
        %p329 = pneg %p328
      $region46: #{tpu_custom_call.1} parent=5 // pred_check_branch
        %331 = sbr.rel (%p329) target = $region48
      $region47: #{tpu_custom_call.1} parent=5 // pred_region
        %s332 = ssub.s32 %s13, 2
        // Predicated region
        $region49: #{tpu_custom_call.1} parent=47 // pred_check
          %p333 = pneg %p82
        $region50: #{tpu_custom_call.1} parent=47 // pred_check_branch
          %335 = sbr.rel (%p333) target = $region52
        $region51: #{tpu_custom_call.1} parent=47 // pred_region
          %p336 = scmp.lt.s32.totalorder %s24, 1
          %s337 = scalar_select %p336, %s24, 1
          %s338 = scalar_lea.vmem %s1, %s337
        $region52: #{tpu_custom_call.1} parent=47 // pred_fallthru
          _
        // Predicated region
        $region53: #{tpu_custom_call.1} parent=47 // pred_check
          %p339 = pneg %p108
        $region54: #{tpu_custom_call.1} parent=47 // pred_check_branch
          %341 = sbr.rel (%p339) target = $region56
        $region55: #{tpu_custom_call.1} parent=47 // pred_region
          %p342 = scmp.lt.s32.totalorder %s24, 1
          %s343 = scalar_select %p342, %s24, 1
          %s344 = scalar_lea.vmem %s2, %s343
        $region56: #{tpu_custom_call.1} parent=47 // pred_fallthru
          _
        // Predicated region
        $region57: #{tpu_custom_call.1} parent=47 // pred_check
          %p345 = pneg %p134
        $region58: #{tpu_custom_call.1} parent=47 // pred_check_branch
          %347 = sbr.rel (%p345) target = $region60
        $region59: #{tpu_custom_call.1} parent=47 // pred_region
          %p348 = scmp.lt.s32.totalorder %s24, 1
          %s349 = scalar_select %p348, %s24, 1
          %s350 = scalar_lea.vmem %s3, %s349
        $region60: #{tpu_custom_call.1} parent=47 // pred_fallthru
          _
      $region48: #{tpu_custom_call.1} parent=5 // pred_fallthru
        _
    $region6: #{tpu_custom_call.1} parent=1 // loop_footer
      %s17 = sadd.s32 1, %s13
    $region7: #{tpu_custom_call.1} parent=1 // loop_footer_branch
      %12 = sbr.rel target = $region3
    $region8: #{tpu_custom_call.1} parent=1 // loop_exit
      _
    %351 = vsyncpa [#allocation3], 1
    %s352 = scalar_lea.sflag [#allocation3], 1
    %353 = vsyncpa %s352, 1

</llo_original>
